<compile_context>
chip_gen: v7x
topology: tpu7x:2x2x1
jax: 0.10.0
libtpu: 0.0.40
codegen_flags: <defaults>
</compile_context>

<pallas_src>
import jax
import jax.numpy as jnp
from jax import lax
from jax.experimental import pallas as pl
from jax.experimental.pallas import tpu as pltpu


_MAX_BATCH_TILE = 8192  # batch rows (sublane axis) per grid step; multiple of 8


def _make_kernel(B, T, D, tb):
    """Build the per-tile kernel (all shape params are static Python ints)."""
    L = T * D

    def kernel(pred_ref, targ_ref, out_ref):
        # pred_ref/targ_ref: (tb, L) blocks.  out_ref: SMEM (1, 4) row for this tile.
        pid = pl.program_id(0)

        # Cast on load (inputs may be bf16 -> HBM traffic stays narrow), math in f32.
        d = pred_ref[...].astype(jnp.float32) - targ_ref[...].astype(jnp.float32)

        # Lane j corresponds to pose-dim (j % D); translation = dims 0..2.
        lane = lax.broadcasted_iota(jnp.int32, (tb, L), 1)
        is_trans = (lane % D) < 3

        # Absolute-pose term.
        ad = jnp.abs(d)

        # Relative (VO) term: difference between consecutive poses of d, i.e. a
        # one-pose (D lanes) shift along the lane axis.
        vd = d[:, D:] - d[:, : L - D]
        avd = jnp.abs(vd)

        # Ragged-tail masking (only emitted when B is not a multiple of the tile).
        if B % tb != 0:
            valid = B - pid * tb                       # < tb only on the last tile
            row = lax.broadcasted_iota(jnp.int32, (tb, L), 0)
            rmask = row < valid
            ad = jnp.where(rmask, ad, 0.0)
            avd = jnp.where(rmask[:, : L - D], avd, 0.0)

        s_all = jnp.sum(ad)
        s_t = jnp.sum(jnp.where(is_trans, ad, 0.0))
        v_all = jnp.sum(avd)
        v_t = jnp.sum(jnp.where(is_trans[:, : L - D], avd, 0.0))

        out_ref[0, 0] = s_t
        out_ref[0, 1] = s_all - s_t
        out_ref[0, 2] = v_t
        out_ref[0, 3] = v_all - v_t

    return kernel


def atloc_plus_criterion(pred, targ, sax=0.0, saq=0.0, srx=0.0, srq=0.0):
    """JAX/Pallas equivalent of AtLocPlusCriterion.forward (L1 losses, mean reduction)."""
    assert pred.shape == targ.shape and pred.ndim == 3
    B, T, D = pred.shape
    assert D > 3, "pose dim must have >3 columns (translation + rotation)"
    assert T >= 2, "need at least 2 poses per sequence for the VO term"
    L = T * D

    # Free, contiguous reshape — no HBM data movement (unlike the old transpose).
    p = pred.reshape(B, L)
    t = targ.reshape(B, L)

    # Single grid step for the common small-batch case; large tiles otherwise.
    tb = B if B <= _MAX_BATCH_TILE else _MAX_BATCH_TILE
    nt = pl.cdiv(B, tb)

    itemsize = jnp.dtype(pred.dtype).itemsize
    cost = pl.CostEstimate(
        flops=8 * B * L,
        transcendentals=0,
        bytes_accessed=2 * B * L * itemsize + nt * 4 * 4,
    )

    partials = pl.pallas_call(
        _make_kernel(B, T, D, tb),
        out_shape=jax.ShapeDtypeStruct((nt, 4), jnp.float32),
        grid=(nt,),
        in_specs=[
            pl.BlockSpec((tb, L), lambda i: (i, 0)),
            pl.BlockSpec((tb, L), lambda i: (i, 0)),
        ],
        out_specs=pl.BlockSpec(
            (1, 4), lambda i: (i, 0), memory_space=pltpu.MemorySpace.SMEM),
        compiler_params=pltpu.CompilerParams(
            dimension_semantics=("parallel",),      # megacore-friendly on v7x
            vmem_limit_bytes=32 * 1024 * 1024,
        ),
        cost_estimate=cost,
    )(p, t)

    # Tiny cross-tile reduction + scalar affine combine done in the wrapper
    # (true element counts, independent of any in-kernel tile masking).
    sums = jnp.sum(partials, axis=0)
    n_abs_t = B * T * 3
    n_abs_q = B * T * (D - 3)
    n_vo_t = B * (T - 1) * 3
    n_vo_q = B * (T - 1) * (D - 3)

    abs_loss = (jnp.exp(-sax) * (sums[0] / n_abs_t) + sax
                + jnp.exp(-saq) * (sums[1] / n_abs_q) + saq)
    vo_loss = (jnp.exp(-srx) * (sums[2] / n_vo_t) + srx
               + jnp.exp(-srq) * (sums[3] / n_vo_q) + srq)
    return abs_loss + vo_loss


def _reference(pred, targ, sax=0.0, saq=0.0, srx=0.0, srq=0.0):
    """Pure-JAX reference mirroring the PyTorch module (sanity check)."""
    B, T, D = pred.shape
    p = pred.reshape(-1, D)
    t = targ.reshape(-1, D)
    abs_loss = (jnp.exp(-sax) * jnp.mean(jnp.abs(p[:, :3] - t[:, :3])) + sax
                + jnp.exp(-saq) * jnp.mean(jnp.abs(p[:, 3:] - t[:, 3:])) + saq)
    pv = (pred[:, 1:, :] - pred[:, :-1, :]).reshape(-1, D)
    tv = (targ[:, 1:, :] - targ[:, :-1, :]).reshape(-1, D)
    vo_loss = (jnp.exp(-srx) * jnp.mean(jnp.abs(pv[:, :3] - tv[:, :3])) + srx
               + jnp.exp(-srq) * jnp.mean(jnp.abs(pv[:, 3:] - tv[:, 3:])) + srq)
    return abs_loss + vo_loss


if __name__ == "__main__":
    # small shapes consistent with the module: batch=2, seq=8, pose_dim=6
    B, T, D = 2, 8, 6
    key = jax.random.PRNGKey(0)
    k1, k2 = jax.random.split(key)
    pred = jax.random.normal(k1, (B, T, D), dtype=jnp.float32)
    targ = jax.random.normal(k2, (B, T, D), dtype=jnp.float32)

    # module __init__ defaults: sax = saq = srx = srq = 0.0
    sax, saq, srx, srq = 0.0, 0.0, 0.0, 0.0

    loss = atloc_plus_criterion(pred, targ, sax, saq, srx, srq)
    loss = jax.block_until_ready(loss)

    ref = _reference(pred, targ, sax, saq, srx, srq)
    assert jnp.allclose(loss, ref, atol=1e-5, rtol=1e-5), (loss, ref)

    print("KERNEL_OK")
</pallas_src>

<mosaic_0001>
module attributes {stable_mosaic.version = 11 : i64} {
  func.func @kernel(%arg0: i32, %arg1: memref<2x48xf32, #tpu.memory_space<vmem>>, %arg2: memref<2x48xf32, #tpu.memory_space<vmem>>, %arg3: memref<1x4xf32, #tpu.memory_space<smem>>) attributes {dimension_semantics = [#tpu.dimension_semantics<parallel>], iteration_bounds = array<i64: 1>, scalar_prefetch = 0 : i64, scratch_operands = 0 : i64, tpu.core_type = #tpu.core_type<tc>, window_params = [{transform_indices = @transform_0, window_bounds = array<i64: 2, 48>}, {transform_indices = @transform_1, window_bounds = array<i64: 2, 48>}, {transform_indices = @transform_2, window_bounds = array<i64: 1, 4>}]} {
    %c0 = arith.constant 0 : index
    %c0_0 = arith.constant 0 : index
    %0 = vector.load %arg1[%c0, %c0_0] : memref<2x48xf32, #tpu.memory_space<vmem>>, vector<2x48xf32>
    %c0_1 = arith.constant 0 : index
    %c0_2 = arith.constant 0 : index
    %1 = vector.load %arg2[%c0_1, %c0_2] : memref<2x48xf32, #tpu.memory_space<vmem>>, vector<2x48xf32>
    %2 = arith.subf %0, %1 : vector<2x48xf32>
    %3 = tpu.iota {dimensions = array<i32: 1>} : vector<2x48xi32>
    %c6_i32 = arith.constant 6 : i32
    %c0_i32 = arith.constant 0 : i32
    %4 = arith.cmpi eq, %c6_i32, %c0_i32 : i32
    %c1_i32 = arith.constant 1 : i32
    %5 = arith.select %4, %c1_i32, %c6_i32 : i32
    %6 = vector.broadcast %5 : i32 to vector<2x48xi32>
    %7 = arith.remsi %3, %6 : vector<2x48xi32>
    %c0_i32_3 = arith.constant 0 : i32
    %8 = vector.broadcast %c0_i32_3 : i32 to vector<2x48xi32>
    %9 = arith.cmpi ne, %7, %8 : vector<2x48xi32>
    %c0_i32_4 = arith.constant 0 : i32
    %10 = vector.broadcast %c0_i32_4 : i32 to vector<2x48xi32>
    %11 = arith.cmpi slt, %7, %10 : vector<2x48xi32>
    %c0_i32_5 = arith.constant 0 : i32
    %12 = arith.cmpi slt, %5, %c0_i32_5 : i32
    %13 = vector.broadcast %12 : i1 to vector<2x48xi1>
    %14 = vector.broadcast %13 : vector<2x48xi1> to vector<2x48xi1>
    %15 = arith.xori %11, %14 : vector<2x48xi1>
    %16 = arith.andi %15, %9 : vector<2x48xi1>
    %17 = vector.broadcast %5 : i32 to vector<2x48xi32>
    %18 = arith.addi %7, %17 : vector<2x48xi32>
    %19 = arith.select %16, %18, %7 : vector<2x48xi1>, vector<2x48xi32>
    %c3_i32 = arith.constant 3 : i32
    %20 = vector.broadcast %c3_i32 : i32 to vector<2x48xi32>
    %21 = arith.cmpi slt, %19, %20 : vector<2x48xi32>
    %22 = math.absf %2 : vector<2x48xf32>
    %23 = vector.extract_strided_slice %2 {offsets = [0, 6], sizes = [2, 42], strides = [1, 1]} : vector<2x48xf32> to vector<2x42xf32>
    %24 = vector.extract_strided_slice %2 {offsets = [0, 0], sizes = [2, 42], strides = [1, 1]} : vector<2x48xf32> to vector<2x42xf32>
    %25 = arith.subf %23, %24 : vector<2x42xf32>
    %26 = math.absf %25 : vector<2x42xf32>
    %27 = vector.shape_cast %22 : vector<2x48xf32> to vector<1x2x48xf32>
    %cst = arith.constant dense<0.000000e+00> : vector<1xf32>
    %28 = vector.multi_reduction <add>, %27, %cst [1, 2] : vector<1x2x48xf32> to vector<1xf32>
    %29 = vector.shape_cast %28 : vector<1xf32> to vector<1x1x1xf32>
    %30 = vector.extract %29[0, 0, 0] : f32 from vector<1x1x1xf32>
    %cst_6 = arith.constant 0.000000e+00 : f32
    %31 = vector.broadcast %cst_6 : f32 to vector<2x48xf32>
    %32 = arith.select %21, %22, %31 : vector<2x48xi1>, vector<2x48xf32>
    %33 = vector.shape_cast %32 : vector<2x48xf32> to vector<1x2x48xf32>
    %cst_7 = arith.constant dense<0.000000e+00> : vector<1xf32>
    %34 = vector.multi_reduction <add>, %33, %cst_7 [1, 2] : vector<1x2x48xf32> to vector<1xf32>
    %35 = vector.shape_cast %34 : vector<1xf32> to vector<1x1x1xf32>
    %36 = vector.extract %35[0, 0, 0] : f32 from vector<1x1x1xf32>
    %37 = vector.shape_cast %26 : vector<2x42xf32> to vector<1x2x42xf32>
    %cst_8 = arith.constant dense<0.000000e+00> : vector<1xf32>
    %38 = vector.multi_reduction <add>, %37, %cst_8 [1, 2] : vector<1x2x42xf32> to vector<1xf32>
    %39 = vector.shape_cast %38 : vector<1xf32> to vector<1x1x1xf32>
    %40 = vector.extract %39[0, 0, 0] : f32 from vector<1x1x1xf32>
    %41 = vector.extract_strided_slice %21 {offsets = [0, 0], sizes = [2, 42], strides = [1, 1]} : vector<2x48xi1> to vector<2x42xi1>
    %cst_9 = arith.constant 0.000000e+00 : f32
    %42 = vector.broadcast %cst_9 : f32 to vector<2x42xf32>
    %43 = arith.select %41, %26, %42 : vector<2x42xi1>, vector<2x42xf32>
    %44 = vector.shape_cast %43 : vector<2x42xf32> to vector<1x2x42xf32>
    %cst_10 = arith.constant dense<0.000000e+00> : vector<1xf32>
    %45 = vector.multi_reduction <add>, %44, %cst_10 [1, 2] : vector<1x2x42xf32> to vector<1xf32>
    %46 = vector.shape_cast %45 : vector<1xf32> to vector<1x1x1xf32>
    %47 = vector.extract %46[0, 0, 0] : f32 from vector<1x1x1xf32>
    %c0_11 = arith.constant 0 : index
    %c0_12 = arith.constant 0 : index
    %48 = memref.load %arg3[%c0_11, %c0_12] : memref<1x4xf32, #tpu.memory_space<smem>>
    memref.store %36, %arg3[%c0_11, %c0_12] : memref<1x4xf32, #tpu.memory_space<smem>>
    %49 = arith.subf %30, %36 : f32
    %c0_13 = arith.constant 0 : index
    %c1 = arith.constant 1 : index
    %50 = memref.load %arg3[%c0_13, %c1] : memref<1x4xf32, #tpu.memory_space<smem>>
    memref.store %49, %arg3[%c0_13, %c1] : memref<1x4xf32, #tpu.memory_space<smem>>
    %c0_14 = arith.constant 0 : index
    %c2 = arith.constant 2 : index
    %51 = memref.load %arg3[%c0_14, %c2] : memref<1x4xf32, #tpu.memory_space<smem>>
    memref.store %47, %arg3[%c0_14, %c2] : memref<1x4xf32, #tpu.memory_space<smem>>
    %52 = arith.subf %40, %47 : f32
    %c0_15 = arith.constant 0 : index
    %c3 = arith.constant 3 : index
    %53 = memref.load %arg3[%c0_15, %c3] : memref<1x4xf32, #tpu.memory_space<smem>>
    memref.store %52, %arg3[%c0_15, %c3] : memref<1x4xf32, #tpu.memory_space<smem>>
    return
  }
  func.func @transform_0(%arg0: i32) -> (i32, i32) {
    %c0_i32 = arith.constant 0 : i32
    %c0_i32_0 = arith.constant 0 : i32
    return %arg0, %c0_i32 : i32, i32
  }
  func.func @transform_1(%arg0: i32) -> (i32, i32) {
    %c0_i32 = arith.constant 0 : i32
    %c0_i32_0 = arith.constant 0 : i32
    return %arg0, %c0_i32 : i32, i32
  }
  func.func @transform_2(%arg0: i32) -> (i32, i32) {
    %c0_i32 = arith.constant 0 : i32
    %c0_i32_0 = arith.constant 0 : i32
    return %arg0, %c0_i32 : i32, i32
  }
}

</mosaic_0001>

<llo_original>
// kernel: tpu_custom_call.1
$region0: #{tpu_custom_call.1}
  #allocation0 [shape = 'u32[]', space=smem, size = 0x4, offset = 0x4, fixed_abs, tag = 'smem constant byte address 0x4 - core index']
  #allocation1 [shape = 'u32[144,128]{1,0:T(1,128)}', space=vmem, size = 0x12000, scoped, tag = 'internal scratch']
  %s0 = inlined_call_operand.hbm [shape: f32[2,48], index: 0, kind: input, shape index: {}]
  %s1 = inlined_call_operand.vmem [shape: f32[2,48], index: 1, kind: input, shape index: {}]
  %s2 = inlined_call_operand.hbm [shape: f32[1,4], index: 2, kind: output, shape index: {}]
  %s3 = sld [smem:[#allocation0]]
  $region22: #{tpu_custom_call.1} parent=0
    _
  %s5 = ssub.s32 1, %s3
  %s6 = scalar_select 0, %s5, %s3
  $region1: #{tpu_custom_call.1} parent=0
    #allocation2 [shape = 'u8[1024]{0}', space=vmem, size = 0x400, scoped, tag = 'input window, operand 0, single buffered']
    #allocation3 [shape = 's32[1]{0}', space=sflag, size = 0x4, scoped, tag = 'scoped memory for tpu_custom_call.1']
    #allocation4 [shape = 's32[1]{0}', space=sflag, size = 0x4, scoped, tag = 'scoped memory for tpu_custom_call.1']
    #allocation5 [shape = 'u8[512]{0}', space=smem, size = 0x200, scoped, tag = 'output window, operand 0, single buffered']
    %7 = vsyncpa [#allocation3], 0
    %8 = vsyncpa [#allocation4], 0
    // Predicated region
    $region2: #{tpu_custom_call.1} parent=1 // pred_check
      _
    $region3: #{tpu_custom_call.1} parent=1 // pred_check_branch
      %10 = sbr.rel (0) target = $region5
    $region4: #{tpu_custom_call.1} parent=1 // pred_region
      %s12 = ssub.s32 32, 32
      %13 = vsyncadd [#allocation3], %s12
      %s15 = sshll.u32 [#allocation2], 4
      %s16 = int_to_ptr.vmem [resolvable:$true] %s15
      %18 = dma.hbm_to_vmem [thread:$0]  %s0, 32, %s16, [#allocation3]
    $region5: #{tpu_custom_call.1} parent=1 // pred_fallthru
      _
    // Predicated region
    $region6: #{tpu_custom_call.1} parent=1 // pred_check
      _
    $region7: #{tpu_custom_call.1} parent=1 // pred_check_branch
      %20 = sbr.rel (0) target = $region9
    $region8: #{tpu_custom_call.1} parent=1 // pred_region
      _
    $region9: #{tpu_custom_call.1} parent=1 // pred_fallthru
      _
    // Predicated region
    $region10: #{tpu_custom_call.1} parent=1 // pred_check
      _
    $region11: #{tpu_custom_call.1} parent=1 // pred_check_branch
      %22 = sbr.rel (0) target = $region13
    $region12: #{tpu_custom_call.1} parent=1 // pred_region
      %23 = dma.done [#allocation3], 32
    $region13: #{tpu_custom_call.1} parent=1 // pred_fallthru
      _
    %v24 = vld [vmem:[#allocation2] sm:$0x3]
    %v25 = vld [vmem:[%s1] sm:$0x3]
    %v26 = vsub.f32 %v24, %v25
    %v27 = vlaneseq
    %v28 = vand.u32 %v27, 127
    %vm29 = vcmp.lt.s32.totalorder %v28, 0
    %v30 = vsub.s32 0, %v28
    %v31 = vsel %vm29, %v30, %v28
    %v32 = vmul.u32.u64.compose %v31, 2863311531
    %v33 = vextract.low.u32 %v32
    %v34 = vextract.high.u32 %v32
    %v35 = vshrl.u32 %v34, 2
    %v36 = vmul.u32 %v35, 6
    %v37 = vsub.s32 %v31, %v36
    %v38 = vsub.s32 0, %v37
    %v39 = vsel %vm29, %v38, %v37
    %vm40 = vcmp.ne.s32.totalorder %v39, 0
    %vm41 = vcmp.lt.s32.totalorder %v39, 0
    %vm42 = vmand %vm41, %vm40
    %v43 = vadd.s32 %v39, 6
    %v44 = vsel %vm42, %v43, %v39
    %vm45 = vcmp.lt.s32.totalorder %v44, 3
    %v46 = vand.u32 2147483647, %v26
    %48 = vrot.lane.b32.xlu0 %v26, 6
    %v49 = vpop.permute.xlu0 %48
    %v51 = vsub.f32 %v26, %v49
    %v52 = vand.u32 2147483647, %v51
    %vm53 = vcmask 386048
    %v54 = vsel %vm53, %v46, 0.0
    %55 = vadd.xlane.f32.xlu0 %v54
    %v56 = vpop.xlane.xlu0 %55
    %v57 = vrot.slane %v56, 4
    %v58 = vadd.f32 %v56, %v57
    %v59 = vrot.slane %v58, 2
    %v60 = vadd.f32 %v58, %v59
    %v61 = vrot.slane %v60, 1
    %v62 = vadd.f32 %v60, %v61
    %s63 = vtos %v62
    %v64 = vsel %vm45, %v46, 0.0
    %v65 = vsel %vm53, %v64, 0.0
    %66 = vadd.xlane.f32.xlu0 %v65
    %v67 = vpop.xlane.xlu0 %66
    %v68 = vrot.slane %v67, 4
    %v69 = vadd.f32 %v67, %v68
    %v70 = vrot.slane %v69, 2
    %v71 = vadd.f32 %v69, %v70
    %v72 = vrot.slane %v71, 1
    %v73 = vadd.f32 %v71, %v72
    %s74 = vtos %v73
    %76 = vrot.lane.b32.xlu0 %v52, 122
    %v77 = vpop.permute.xlu0 %76
    %vm79 = vcmask 336896
    %v80 = vsel %vm79, %v77, 0.0
    %81 = vadd.xlane.f32.xlu0 %v80
    %v82 = vpop.xlane.xlu0 %81
    %v83 = vrot.slane %v82, 4
    %v84 = vadd.f32 %v82, %v83
    %v85 = vrot.slane %v84, 2
    %v86 = vadd.f32 %v84, %v85
    %v87 = vrot.slane %v86, 1
    %v88 = vadd.f32 %v86, %v87
    %s89 = vtos %v88
    %v90 = vsel %vm45, %v77, 0.0
    %v91 = vsel %vm79, %v90, 0.0
    %92 = vadd.xlane.f32.xlu0 %v91
    %v93 = vpop.xlane.xlu0 %92
    %v94 = vrot.slane %v93, 4
    %v95 = vadd.f32 %v93, %v94
    %v96 = vrot.slane %v95, 2
    %v97 = vadd.f32 %v95, %v96
    %v98 = vrot.slane %v97, 1
    %v99 = vadd.f32 %v97, %v98
    %s100 = vtos %v99
    %s101 = scalar_lea.smem [#allocation5], 0
    %102 = sst [smem:[%s101]] %s74
    %s103 = ssub.f32 %s63, %s74
    %s104 = scalar_lea.smem [#allocation5], 1
    %105 = sst [smem:[%s104]] %s103
    %s106 = scalar_lea.smem [#allocation5], 2
    %107 = sst [smem:[%s106]] %s100
    %s108 = ssub.f32 %s89, %s100
    %s109 = scalar_lea.smem [#allocation5], 3
    %110 = sst [smem:[%s109]] %s108
    // Predicated region
    $region14: #{tpu_custom_call.1} parent=1 // pred_check
      _
    $region15: #{tpu_custom_call.1} parent=1 // pred_check_branch
      %112 = sbr.rel (0) target = $region17
    $region16: #{tpu_custom_call.1} parent=1 // pred_region
      %s114 = ssub.s32 16, 16
      %115 = vsyncadd [#allocation4], %s114
      %118 = dma.smem_to_hbm [#allocation5], 16, %s2, [#allocation4]
    $region17: #{tpu_custom_call.1} parent=1 // pred_fallthru
      _
    // Predicated region
    $region18: #{tpu_custom_call.1} parent=1 // pred_check
      _
    $region19: #{tpu_custom_call.1} parent=1 // pred_check_branch
      %120 = sbr.rel (0) target = $region21
    $region20: #{tpu_custom_call.1} parent=1 // pred_region
      %121 = dma.done [#allocation4], 16
    $region21: #{tpu_custom_call.1} parent=1 // pred_fallthru
      _
    %122 = sfence
    %123 = vsyncpa [#allocation3], 1
    %124 = vsyncpa [#allocation4], 1

</llo_original>
